<compile_context>
chip_gen: v7x
topology: tpu7x:2x2x1
jax: 0.10.0
libtpu: 0.0.40
codegen_flags: <defaults>
</compile_context>

<pallas_src>
import functools

import jax
import jax.numpy as jnp
from jax import lax
from jax.experimental import pallas as pl
from jax.experimental.pallas import tpu as pltpu


# --------------------------------------------------------------------------
# kernel
# --------------------------------------------------------------------------
def mlp_relu_kernel(x_ref, w_in_ref, b_in_ref, w_h_ref, b_h_ref,
                    w_last_ref, b_last_ref, out_ref, *,
                    num_hidden_layers, compute_dtype, clip_input):
    cd = compute_dtype

    def mm(a, w):
        # bf16 MXU operands (all generations have bf16 MXU), f32 accumulation.
        if a.dtype != w.dtype:
            a = a.astype(w.dtype)
        return jnp.dot(a, w, preferred_element_type=jnp.float32)

    xv = x_ref[...]
    if clip_input:  # torch forward(..., unscaled=True) path: hardtanh(x,0,1)
        xv = jnp.clip(xv.astype(jnp.float32), 0.0, 1.0)

    # fc_in + ReLU; activations carried in `cd` (bf16 on v6e/v7x, f32 on v5e)
    h = mm(xv, w_in_ref[...]).astype(cd) + b_in_ref[...]
    h = jnp.maximum(h, 0)

    # hidden layers: Linear -> hardtanh(0, 1)
    if num_hidden_layers <= 8:
        # small L: static unroll gives the scheduler full visibility
        for i in range(num_hidden_layers):
            h = mm(h, w_h_ref[i]).astype(cd) + b_h_ref[i]
            h = jnp.clip(h, 0, 1)
    else:
        # large L: keep instruction footprint flat with a fori_loop and
        # dynamic leading-axis indexing into the resident weight stack
        def body(i, h):
            h = mm(h, w_h_ref[i]).astype(cd) + b_h_ref[i]
            return jnp.clip(h, 0, 1)
        h = lax.fori_loop(0, num_hidden_layers, body, h)

    # fc_last (no activation) — lane-dense padded f32 output slab
    y = mm(h, w_last_ref[...]) + b_last_ref[...].astype(jnp.float32)
    out_ref[...] = y.astype(out_ref.dtype)


# --------------------------------------------------------------------------
# helpers
# --------------------------------------------------------------------------
def _round_up(n, m):
    return ((n + m - 1) // m) * m


def _pad_to(a, shape):
    pads = [(0, t - s) for s, t in zip(a.shape, shape)]
    if any(p[1] for p in pads):
        return jnp.pad(a, pads)
    return a


def _device_kind():
    try:
        return jax.devices()[0].device_kind.lower()
    except Exception:
        return ""


def _vmem_capacity_bytes(kind):
    try:
        info = pltpu.get_tpu_info()
        cap = getattr(info, "vmem_capacity_bytes", None)
        if cap:
            return int(cap)
    except Exception:
        pass
    if ("v7" in kind) or ("tpu7" in kind):
        return 64 << 20     # v7x: 64 MiB per TensorCore
    return 128 << 20        # v5e / v6e


# --------------------------------------------------------------------------
# forward implementation (one pallas_call)
# --------------------------------------------------------------------------
def _forward_impl(x, params, *, tile_b, use_bf16_matmul, act_dtype,
                  single_buffer_weights, core_parallel, x_buffers,
                  vmem_capacity, unscaled):
    w_in, b_in, w_h, b_h, w_last, b_last = params
    batch, in_features = x.shape
    hidden = w_in.shape[1]
    out_features = w_last.shape[1]
    L = w_h.shape[0]

    # ---- lane-dense zero padding of feature dims (padded K columns hit zero
    #      weight rows; padded hidden columns stay 0 through ReLU/hardtanh) --
    f_pad = _round_up(in_features, 128)
    h_pad = _round_up(hidden, 128)
    o_pad = _round_up(out_features, 128)

    x_dtype = jnp.bfloat16 if use_bf16_matmul else jnp.float32
    w_dtype = jnp.bfloat16 if use_bf16_matmul else jnp.float32

    x_p = _pad_to(x.astype(x_dtype), (batch, f_pad))
    w_in_p = _pad_to(w_in, (f_pad, h_pad)).astype(w_dtype)
    w_h_p = _pad_to(w_h, (L, h_pad, h_pad)).astype(w_dtype)
    w_last_p = _pad_to(w_last, (h_pad, o_pad)).astype(w_dtype)
    b_in_p = _pad_to(b_in, (1, h_pad)).astype(act_dtype)
    b_h_p = _pad_to(b_h, (L, 1, h_pad)).astype(act_dtype)
    b_last_p = _pad_to(b_last, (1, o_pad)).astype(act_dtype)

    # ---- batch tile: big tiles amortize per-step overhead; NO batch-padding
    #      copy (Pallas masks the ragged last block) ----
    if tile_b is None:
        tile_b = 1024
    tile_b = max(16, _round_up(min(tile_b, _round_up(batch, 16)), 16))
    if core_parallel and batch >= 32:
        # at least 2 grid steps so both v7x TensorCores get work
        tile_b = min(tile_b, _round_up(pl.cdiv(batch, 2), 16))

    x_bpe = jnp.dtype(x_dtype).itemsize
    w_bpe = jnp.dtype(w_dtype).itemsize
    a_bpe = jnp.dtype(act_dtype).itemsize
    w_copies = 1 if single_buffer_weights else 2
    weight_bytes = w_copies * (
        (f_pad * h_pad + L * h_pad * h_pad + h_pad * o_pad) * w_bpe
        + ((L + 1) * h_pad + o_pad) * a_bpe)

    def vmem_estimate(tb):
        io = x_buffers * tb * f_pad * x_bpe + 2 * tb * o_pad * 4
        act = 6 * tb * h_pad * 4             # f32 accumulators + working set
        return weight_bytes + io + act + (2 << 20)

    budget = int(vmem_capacity * 0.85)
    # TODO(synk): for very large hidden/L on v7x (64 MiB VMEM) stream w_h one
    # layer at a time (emit_pipeline over the layer axis) instead of only
    # shrinking tile_b.
    while vmem_estimate(tile_b) > budget and tile_b > 64:
        tile_b = max(64, _round_up(tile_b // 2, 16))

    grid = (pl.cdiv(batch, tile_b),)
    vmem_limit = int(min(max(vmem_estimate(tile_b), 32 << 20), budget))

    def spec(shape, imap, buffers=None):
        if buffers is not None and buffers != 2:
            try:
                return pl.BlockSpec(shape, imap,
                                    pipeline_mode=pl.Buffered(buffers))
            except (TypeError, AttributeError):
                pass
        return pl.BlockSpec(shape, imap)

    w_buf = 1 if single_buffer_weights else None
    in_specs = [
        # x: one batch tile per grid step (pipelined HBM->VMEM DMA)
        spec((tile_b, f_pad), lambda i: (i, 0), buffers=x_buffers),
        # weights / biases: constant index_map -> fetched once, VMEM-resident,
        # single-buffered (no point double-buffering a constant block)
        spec((f_pad, h_pad), lambda i: (0, 0), buffers=w_buf),
        spec((1, h_pad), lambda i: (0, 0), buffers=w_buf),
        spec((L, h_pad, h_pad), lambda i: (0, 0, 0), buffers=w_buf),
        spec((L, 1, h_pad), lambda i: (0, 0, 0), buffers=w_buf),
        spec((h_pad, o_pad), lambda i: (0, 0), buffers=w_buf),
        spec((1, o_pad), lambda i: (0, 0), buffers=w_buf),
    ]

    dim_sem = (pltpu.CORE_PARALLEL,) if core_parallel else ("parallel",)

    kernel = functools.partial(mlp_relu_kernel,
                               num_hidden_layers=L,
                               compute_dtype=act_dtype,
                               clip_input=unscaled)

    out_padded = pl.pallas_call(
        kernel,
        out_shape=jax.ShapeDtypeStruct((batch, o_pad), jnp.float32),
        grid=grid,
        in_specs=in_specs,
        out_specs=pl.BlockSpec((tile_b, o_pad), lambda i: (i, 0)),
        compiler_params=pltpu.CompilerParams(
            dimension_semantics=dim_sem,
            vmem_limit_bytes=vmem_limit),
    )(x_p, w_in_p, b_in_p, w_h_p, b_h_p, w_last_p, b_last_p)

    # slice the lane-dense padded slab back to the true output width
    return out_padded[:, :out_features]


# --------------------------------------------------------------------------
# public wrapper: per-generation option selection + safe fallback
# --------------------------------------------------------------------------
def mlp_relu_forward(x, params, *, tile_b=None, use_bf16_matmul=True,
                     unscaled=False):
    """MLP_relu.forward for x [batch, in_features] in one Pallas call."""
    kind = _device_kind()
    is_v5 = "v5" in kind
    is_v7 = ("v7" in kind) or ("tpu7" in kind)
    bf16_vpu = ("v6" in kind) or is_v7          # bf16 VALU only on v6e/v7x
    act_dtype = jnp.bfloat16 if (use_bf16_matmul and bf16_vpu) else jnp.float32

    opts = dict(tile_b=tile_b, use_bf16_matmul=use_bf16_matmul,
                act_dtype=act_dtype, single_buffer_weights=True,
                core_parallel=is_v7, x_buffers=3 if is_v5 else 2,
                vmem_capacity=_vmem_capacity_bytes(kind), unscaled=unscaled)
    try:
        out = _forward_impl(x, params, **opts)
        jax.block_until_ready(out)
        return out
    except Exception:
        # Conservative retry (default double-buffering, plain "parallel",
        # f32 activations) so an unsupported option never kills the run.
        opts.update(single_buffer_weights=False, core_parallel=False,
                    act_dtype=jnp.float32, x_buffers=2)
        return _forward_impl(x, params, **opts)


# --------------------------------------------------------------------------
# params / reference
# --------------------------------------------------------------------------
def init_params(key, input_feature, hidden_nodes, output_features,
                num_hidden_layers):
    """Mimics torch.nn.Linear's U(-1/sqrt(fan_in), 1/sqrt(fan_in)) init."""
    ks = jax.random.split(key, 6)

    def uniform(k, shape, fan_in):
        bound = 1.0 / jnp.sqrt(fan_in)
        return jax.random.uniform(k, shape, jnp.float32, -bound, bound)

    # stored pre-transposed: [in, out]; biases kept 2D [1, out]
    w_in = uniform(ks[0], (input_feature, hidden_nodes), input_feature)
    b_in = uniform(ks[1], (1, hidden_nodes), input_feature)
    w_h = uniform(ks[2], (num_hidden_layers, hidden_nodes, hidden_nodes),
                  hidden_nodes)
    b_h = uniform(ks[3], (num_hidden_layers, 1, hidden_nodes), hidden_nodes)
    w_last = uniform(ks[4], (hidden_nodes, output_features), hidden_nodes)
    b_last = uniform(ks[5], (1, output_features), hidden_nodes)
    return (w_in, b_in, w_h, b_h, w_last, b_last)


def mlp_relu_reference(x, params):
    w_in, b_in, w_h, b_h, w_last, b_last = params
    h = jnp.maximum(x @ w_in + b_in, 0.0)
    for i in range(w_h.shape[0]):
        h = jnp.clip(h @ w_h[i] + b_h[i], 0.0, 1.0)
    return h @ w_last + b_last


# --------------------------------------------------------------------------
# self-test
# --------------------------------------------------------------------------
if __name__ == "__main__":
    key = jax.random.PRNGKey(0)
    k_params, k_params3, k_x1, k_x2, k_x3 = jax.random.split(key, 5)

    input_feature = 16
    hidden_nodes = 20      # MLP_relu default hidden_nodes=20
    output_features = 1    # MLP_relu default output_features=1
    num_hidden_layers = 1  # MLP_relu default num_hidden_layers=1

    params = init_params(k_params, input_feature, hidden_nodes,
                         output_features, num_hidden_layers)

    # case 1: small batch, single (partial) tile, f32 MXU operands
    x1 = jax.random.uniform(k_x1, (8, input_feature), jnp.float32)
    out1 = jax.block_until_ready(
        mlp_relu_forward(x1, params, use_bf16_matmul=False))
    ref1 = mlp_relu_reference(x1, params)
    assert out1.shape == (8, output_features)
    assert jnp.allclose(out1, ref1, atol=1e-4, rtol=1e-4)

    # case 2: multi-tile ragged grid (3 steps, last block partial) + bf16
    #         default path (bf16 x / weights, f32 accumulation)
    x2 = jax.random.uniform(k_x2, (300, input_feature), jnp.float32)
    out2 = jax.block_until_ready(mlp_relu_forward(x2, params, tile_b=128))
    ref2 = mlp_relu_reference(x2, params)
    assert out2.shape == (300, output_features)
    assert jnp.allclose(out2, ref2, atol=2e-2, rtol=2e-2)

    # case 3: deep network (L=10) -> fori_loop hidden-layer path, f32 operands
    params3 = init_params(k_params3, input_feature, hidden_nodes,
                          output_features, 10)
    x3 = jax.random.uniform(k_x3, (64, input_feature), jnp.float32)
    out3 = jax.block_until_ready(
        mlp_relu_forward(x3, params3, use_bf16_matmul=False))
    ref3 = mlp_relu_reference(x3, params3)
    assert out3.shape == (64, output_features)
    assert jnp.allclose(out3, ref3, atol=1e-3, rtol=1e-3)

    print("KERNEL_OK")
</pallas_src>

<mosaic_0001>
module attributes {stable_mosaic.version = 11 : i64} {
  func.func @mlp_relu_kernel(%arg0: i32, %arg1: memref<16x128xf32, #tpu.memory_space<vmem>>, %arg2: memref<128x128xf32, #tpu.memory_space<vmem>>, %arg3: memref<1x128xf32, #tpu.memory_space<vmem>>, %arg4: memref<1x128x128xf32, #tpu.memory_space<vmem>>, %arg5: memref<1x1x128xf32, #tpu.memory_space<vmem>>, %arg6: memref<128x128xf32, #tpu.memory_space<vmem>>, %arg7: memref<1x128xf32, #tpu.memory_space<vmem>>, %arg8: memref<16x128xf32, #tpu.memory_space<vmem>>) attributes {dimension_semantics = [#tpu.dimension_semantics<parallel>], iteration_bounds = array<i64: 1>, scalar_prefetch = 0 : i64, scratch_operands = 0 : i64, tpu.core_type = #tpu.core_type<tc>, window_params = [{transform_indices = @transform_0, window_bounds = array<i64: 16, 128>}, {pipeline_mode = #tpu.pipeline_mode<synchronous>, transform_indices = @transform_1, window_bounds = array<i64: 128, 128>}, {pipeline_mode = #tpu.pipeline_mode<synchronous>, transform_indices = @transform_2, window_bounds = array<i64: 1, 128>}, {pipeline_mode = #tpu.pipeline_mode<synchronous>, transform_indices = @transform_3, window_bounds = array<i64: 1, 128, 128>}, {pipeline_mode = #tpu.pipeline_mode<synchronous>, transform_indices = @transform_4, window_bounds = array<i64: 1, 1, 128>}, {pipeline_mode = #tpu.pipeline_mode<synchronous>, transform_indices = @transform_5, window_bounds = array<i64: 128, 128>}, {pipeline_mode = #tpu.pipeline_mode<synchronous>, transform_indices = @transform_6, window_bounds = array<i64: 1, 128>}, {transform_indices = @transform_7, window_bounds = array<i64: 16, 128>}]} {
    %c0 = arith.constant 0 : index
    %c0_0 = arith.constant 0 : index
    %0 = vector.load %arg1[%c0, %c0_0] : memref<16x128xf32, #tpu.memory_space<vmem>>, vector<16x128xf32>
    %c0_1 = arith.constant 0 : index
    %c0_2 = arith.constant 0 : index
    %1 = vector.load %arg2[%c0_1, %c0_2] : memref<128x128xf32, #tpu.memory_space<vmem>>, vector<128x128xf32>
    %cst = arith.constant dense<0.000000e+00> : vector<16x128xf32>
    %2 = tpu.matmul %0, %1, %cst {dimension_numbers = #tpu.dot_dimension_numbers<[1], [0], [0], [1], [0, 0, 1, 1], [], []>} : vector<16x128xf32>, vector<128x128xf32>, vector<16x128xf32> -> vector<16x128xf32>
    %c0_3 = arith.constant 0 : index
    %c0_4 = arith.constant 0 : index
    %3 = vector.load %arg3[%c0_3, %c0_4] : memref<1x128xf32, #tpu.memory_space<vmem>>, vector<1x128xf32>
    %4 = vector.broadcast %3 : vector<1x128xf32> to vector<16x128xf32>
    %5 = arith.addf %2, %4 : vector<16x128xf32>
    %cst_5 = arith.constant 0.000000e+00 : f32
    %6 = vector.broadcast %cst_5 : f32 to vector<16x128xf32>
    %7 = arith.maximumf %5, %6 : vector<16x128xf32>
    %c0_6 = arith.constant 0 : index
    %c0_7 = arith.constant 0 : index
    %c0_8 = arith.constant 0 : index
    %8 = vector.load %arg4[%c0_6, %c0_7, %c0_8] : memref<1x128x128xf32, #tpu.memory_space<vmem>>, vector<1x128x128xf32>
    %9 = vector.shape_cast %8 : vector<1x128x128xf32> to vector<128x128xf32>
    %cst_9 = arith.constant dense<0.000000e+00> : vector<16x128xf32>
    %10 = tpu.matmul %7, %9, %cst_9 {dimension_numbers = #tpu.dot_dimension_numbers<[1], [0], [0], [1], [0, 0, 1, 1], [], []>} : vector<16x128xf32>, vector<128x128xf32>, vector<16x128xf32> -> vector<16x128xf32>
    %c0_10 = arith.constant 0 : index
    %c0_11 = arith.constant 0 : index
    %c0_12 = arith.constant 0 : index
    %11 = vector.load %arg5[%c0_10, %c0_11, %c0_12] : memref<1x1x128xf32, #tpu.memory_space<vmem>>, vector<1x1x128xf32>
    %12 = vector.shape_cast %11 : vector<1x1x128xf32> to vector<1x128xf32>
    %13 = vector.broadcast %12 : vector<1x128xf32> to vector<16x128xf32>
    %14 = arith.addf %10, %13 : vector<16x128xf32>
    %c0_i32 = arith.constant 0 : i32
    %c1_i32 = arith.constant 1 : i32
    %15 = arith.sitofp %c0_i32 : i32 to f32
    %16 = vector.broadcast %15 : f32 to vector<16x128xf32>
    %17 = arith.maximumf %16, %14 : vector<16x128xf32>
    %18 = arith.sitofp %c1_i32 : i32 to f32
    %19 = vector.broadcast %18 : f32 to vector<16x128xf32>
    %20 = arith.minimumf %19, %17 : vector<16x128xf32>
    %c0_13 = arith.constant 0 : index
    %c0_14 = arith.constant 0 : index
    %21 = vector.load %arg6[%c0_13, %c0_14] : memref<128x128xf32, #tpu.memory_space<vmem>>, vector<128x128xf32>
    %cst_15 = arith.constant dense<0.000000e+00> : vector<16x128xf32>
    %22 = tpu.matmul %20, %21, %cst_15 {dimension_numbers = #tpu.dot_dimension_numbers<[1], [0], [0], [1], [0, 0, 1, 1], [], []>} : vector<16x128xf32>, vector<128x128xf32>, vector<16x128xf32> -> vector<16x128xf32>
    %c0_16 = arith.constant 0 : index
    %c0_17 = arith.constant 0 : index
    %23 = vector.load %arg7[%c0_16, %c0_17] : memref<1x128xf32, #tpu.memory_space<vmem>>, vector<1x128xf32>
    %24 = vector.broadcast %23 : vector<1x128xf32> to vector<16x128xf32>
    %25 = arith.addf %22, %24 : vector<16x128xf32>
    %c0_18 = arith.constant 0 : index
    %c0_19 = arith.constant 0 : index
    %26 = vector.load %arg8[%c0_18, %c0_19] : memref<16x128xf32, #tpu.memory_space<vmem>>, vector<16x128xf32>
    tpu.vector_store %arg8[%c0_18, %c0_19], %25 {strides = array<i32>} : memref<16x128xf32, #tpu.memory_space<vmem>>, vector<16x128xf32>,
    return
  }
  func.func @transform_0(%arg0: i32) -> (i32, i32) {
    %c0_i32 = arith.constant 0 : i32
    %c0_i32_0 = arith.constant 0 : i32
    return %arg0, %c0_i32 : i32, i32
  }
  func.func @transform_1(%arg0: i32) -> (i32, i32) {
    %c0_i32 = arith.constant 0 : i32
    %c0_i32_0 = arith.constant 0 : i32
    %c0_i32_1 = arith.constant 0 : i32
    return %c0_i32, %c0_i32_0 : i32, i32
  }
  func.func @transform_2(%arg0: i32) -> (i32, i32) {
    %c0_i32 = arith.constant 0 : i32
    %c0_i32_0 = arith.constant 0 : i32
    %c0_i32_1 = arith.constant 0 : i32
    return %c0_i32, %c0_i32_0 : i32, i32
  }
  func.func @transform_3(%arg0: i32) -> (i32, i32, i32) {
    %c0_i32 = arith.constant 0 : i32
    %c0_i32_0 = arith.constant 0 : i32
    %c0_i32_1 = arith.constant 0 : i32
    %c0_i32_2 = arith.constant 0 : i32
    return %c0_i32, %c0_i32_0, %c0_i32_1 : i32, i32, i32
  }
  func.func @transform_4(%arg0: i32) -> (i32, i32, i32) {
    %c0_i32 = arith.constant 0 : i32
    %c0_i32_0 = arith.constant 0 : i32
    %c0_i32_1 = arith.constant 0 : i32
    %c0_i32_2 = arith.constant 0 : i32
    return %c0_i32, %c0_i32_0, %c0_i32_1 : i32, i32, i32
  }
  func.func @transform_5(%arg0: i32) -> (i32, i32) {
    %c0_i32 = arith.constant 0 : i32
    %c0_i32_0 = arith.constant 0 : i32
    %c0_i32_1 = arith.constant 0 : i32
    return %c0_i32, %c0_i32_0 : i32, i32
  }
  func.func @transform_6(%arg0: i32) -> (i32, i32) {
    %c0_i32 = arith.constant 0 : i32
    %c0_i32_0 = arith.constant 0 : i32
    %c0_i32_1 = arith.constant 0 : i32
    return %c0_i32, %c0_i32_0 : i32, i32
  }
  func.func @transform_7(%arg0: i32) -> (i32, i32) {
    %c0_i32 = arith.constant 0 : i32
    %c0_i32_0 = arith.constant 0 : i32
    return %arg0, %c0_i32 : i32, i32
  }
}

module attributes {stable_mosaic.version = 11 : i64} {
  func.func @mlp_relu_kernel(%arg0: i32, %arg1: memref<16x128xf32, #tpu.memory_space<vmem>>, %arg2: memref<128x128xf32, #tpu.memory_space<vmem>>, %arg3: memref<1x128xf32, #tpu.memory_space<vmem>>, %arg4: memref<1x128x128xf32, #tpu.memory_space<vmem>>, %arg5: memref<1x1x128xf32, #tpu.memory_space<vmem>>, %arg6: memref<128x128xf32, #tpu.memory_space<vmem>>, %arg7: memref<1x128xf32, #tpu.memory_space<vmem>>, %arg8: memref<16x128xf32, #tpu.memory_space<vmem>>) attributes {dimension_semantics = [#tpu.dimension_semantics<parallel>], iteration_bounds = array<i64: 1>, scalar_prefetch = 0 : i64, scratch_operands = 0 : i64, tpu.core_type = #tpu.core_type<tc>, window_params = [{transform_indices = @transform_0, window_bounds = array<i64: 16, 128>}, {pipeline_mode = #tpu.pipeline_mode<synchronous>, transform_indices = @transform_1, window_bounds = array<i64: 128, 128>}, {pipeline_mode = #tpu.pipeline_mode<synchronous>, transform_indices = @transform_2, window_bounds = array<i64: 1, 128>}, {pipeline_mode = #tpu.pipeline_mode<synchronous>, transform_indices = @transform_3, window_bounds = array<i64: 1, 128, 128>}, {pipeline_mode = #tpu.pipeline_mode<synchronous>, transform_indices = @transform_4, window_bounds = array<i64: 1, 1, 128>}, {pipeline_mode = #tpu.pipeline_mode<synchronous>, transform_indices = @transform_5, window_bounds = array<i64: 128, 128>}, {pipeline_mode = #tpu.pipeline_mode<synchronous>, transform_indices = @transform_6, window_bounds = array<i64: 1, 128>}, {transform_indices = @transform_7, window_bounds = array<i64: 16, 128>}]} {
    %c0 = arith.constant 0 : index
    %c0_0 = arith.constant 0 : index
    %0 = vector.load %arg1[%c0, %c0_0] : memref<16x128xf32, #tpu.memory_space<vmem>>, vector<16x128xf32>
    %c0_1 = arith.constant 0 : index
    %c0_2 = arith.constant 0 : index
    %1 = vector.load %arg2[%c0_1, %c0_2] : memref<128x128xf32, #tpu.memory_space<vmem>>, vector<128x128xf32>
    %cst = arith.constant dense<0.000000e+00> : vector<16x128xf32>
    %2 = tpu.matmul %0, %1, %cst {dimension_numbers = #tpu.dot_dimension_numbers<[1], [0], [0], [1], [0, 0, 1, 1], [], []>} : vector<16x128xf32>, vector<128x128xf32>, vector<16x128xf32> -> vector<16x128xf32>
    %c0_3 = arith.constant 0 : index
    %c0_4 = arith.constant 0 : index
    %3 = vector.load %arg3[%c0_3, %c0_4] : memref<1x128xf32, #tpu.memory_space<vmem>>, vector<1x128xf32>
    %4 = vector.broadcast %3 : vector<1x128xf32> to vector<16x128xf32>
    %5 = arith.addf %2, %4 : vector<16x128xf32>
    %cst_5 = arith.constant 0.000000e+00 : f32
    %6 = vector.broadcast %cst_5 : f32 to vector<16x128xf32>
    %7 = arith.maximumf %5, %6 : vector<16x128xf32>
    %c0_6 = arith.constant 0 : index
    %c0_7 = arith.constant 0 : index
    %c0_8 = arith.constant 0 : index
    %8 = vector.load %arg4[%c0_6, %c0_7, %c0_8] : memref<1x128x128xf32, #tpu.memory_space<vmem>>, vector<1x128x128xf32>
    %9 = vector.shape_cast %8 : vector<1x128x128xf32> to vector<128x128xf32>
    %cst_9 = arith.constant dense<0.000000e+00> : vector<16x128xf32>
    %10 = tpu.matmul %7, %9, %cst_9 {dimension_numbers = #tpu.dot_dimension_numbers<[1], [0], [0], [1], [0, 0, 1, 1], [], []>} : vector<16x128xf32>, vector<128x128xf32>, vector<16x128xf32> -> vector<16x128xf32>
    %c0_10 = arith.constant 0 : index
    %c0_11 = arith.constant 0 : index
    %c0_12 = arith.constant 0 : index
    %11 = vector.load %arg5[%c0_10, %c0_11, %c0_12] : memref<1x1x128xf32, #tpu.memory_space<vmem>>, vector<1x1x128xf32>
    %12 = vector.shape_cast %11 : vector<1x1x128xf32> to vector<1x128xf32>
    %13 = vector.broadcast %12 : vector<1x128xf32> to vector<16x128xf32>
    %14 = arith.addf %10, %13 : vector<16x128xf32>
    %c0_i32 = arith.constant 0 : i32
    %c1_i32 = arith.constant 1 : i32
    %15 = arith.sitofp %c0_i32 : i32 to f32
    %16 = vector.broadcast %15 : f32 to vector<16x128xf32>
    %17 = arith.maximumf %16, %14 : vector<16x128xf32>
    %18 = arith.sitofp %c1_i32 : i32 to f32
    %19 = vector.broadcast %18 : f32 to vector<16x128xf32>
    %20 = arith.minimumf %19, %17 : vector<16x128xf32>
    %c0_13 = arith.constant 0 : index
    %c0_14 = arith.constant 0 : index
    %21 = vector.load %arg6[%c0_13, %c0_14] : memref<128x128xf32, #tpu.memory_space<vmem>>, vector<128x128xf32>
    %cst_15 = arith.constant dense<0.000000e+00> : vector<16x128xf32>
    %22 = tpu.matmul %20, %21, %cst_15 {dimension_numbers = #tpu.dot_dimension_numbers<[1], [0], [0], [1], [0, 0, 1, 1], [], []>} : vector<16x128xf32>, vector<128x128xf32>, vector<16x128xf32> -> vector<16x128xf32>
    %c0_16 = arith.constant 0 : index
    %c0_17 = arith.constant 0 : index
    %23 = vector.load %arg7[%c0_16, %c0_17] : memref<1x128xf32, #tpu.memory_space<vmem>>, vector<1x128xf32>
    %24 = vector.broadcast %23 : vector<1x128xf32> to vector<16x128xf32>
    %25 = arith.addf %22, %24 : vector<16x128xf32>
    %c0_18 = arith.constant 0 : index
    %c0_19 = arith.constant 0 : index
    %26 = vector.load %arg8[%c0_18, %c0_19] : memref<16x128xf32, #tpu.memory_space<vmem>>, vector<16x128xf32>
    tpu.vector_store %arg8[%c0_18, %c0_19], %25 {strides = array<i32>} : memref<16x128xf32, #tpu.memory_space<vmem>>, vector<16x128xf32>,
    return
  }
  func.func @transform_0(%arg0: i32) -> (i32, i32) {
    %c0_i32 = arith.constant 0 : i32
    %c0_i32_0 = arith.constant 0 : i32
    return %arg0, %c0_i32 : i32, i32
  }
  func.func @transform_1(%arg0: i32) -> (i32, i32) {
    %c0_i32 = arith.constant 0 : i32
    %c0_i32_0 = arith.constant 0 : i32
    %c0_i32_1 = arith.constant 0 : i32
    return %c0_i32, %c0_i32_0 : i32, i32
  }
  func.func @transform_2(%arg0: i32) -> (i32, i32) {
    %c0_i32 = arith.constant 0 : i32
    %c0_i32_0 = arith.constant 0 : i32
    %c0_i32_1 = arith.constant 0 : i32
    return %c0_i32, %c0_i32_0 : i32, i32
  }
  func.func @transform_3(%arg0: i32) -> (i32, i32, i32) {
    %c0_i32 = arith.constant 0 : i32
    %c0_i32_0 = arith.constant 0 : i32
    %c0_i32_1 = arith.constant 0 : i32
    %c0_i32_2 = arith.constant 0 : i32
    return %c0_i32, %c0_i32_0, %c0_i32_1 : i32, i32, i32
  }
  func.func @transform_4(%arg0: i32) -> (i32, i32, i32) {
    %c0_i32 = arith.constant 0 : i32
    %c0_i32_0 = arith.constant 0 : i32
    %c0_i32_1 = arith.constant 0 : i32
    %c0_i32_2 = arith.constant 0 : i32
    return %c0_i32, %c0_i32_0, %c0_i32_1 : i32, i32, i32
  }
  func.func @transform_5(%arg0: i32) -> (i32, i32) {
    %c0_i32 = arith.constant 0 : i32
    %c0_i32_0 = arith.constant 0 : i32
    %c0_i32_1 = arith.constant 0 : i32
    return %c0_i32, %c0_i32_0 : i32, i32
  }
  func.func @transform_6(%arg0: i32) -> (i32, i32) {
    %c0_i32 = arith.constant 0 : i32
    %c0_i32_0 = arith.constant 0 : i32
    %c0_i32_1 = arith.constant 0 : i32
    return %c0_i32, %c0_i32_0 : i32, i32
  }
  func.func @transform_7(%arg0: i32) -> (i32, i32) {
    %c0_i32 = arith.constant 0 : i32
    %c0_i32_0 = arith.constant 0 : i32
    return %arg0, %c0_i32 : i32, i32
  }
}

</mosaic_0001>

<llo_original>
// kernel: tpu_custom_call.1
$region0: #{tpu_custom_call.1}
  #allocation0 [shape = 'u32[]', space=smem, size = 0x4, offset = 0x4, fixed_abs, tag = 'smem constant byte address 0x4 - core index']
  #allocation1 [shape = 'u32[144,128]{1,0:T(1,128)}', space=vmem, size = 0x12000, scoped, tag = 'internal scratch']
  %s0 = inlined_call_operand.hbm [shape: f32[8,128], index: 0, kind: input, shape index: {}]
  %s1 = inlined_call_operand.hbm [shape: f32[128,128], index: 1, kind: input, shape index: {}]
  %s2 = inlined_call_operand.vmem [shape: f32[1,128], index: 2, kind: input, shape index: {}]
  %s3 = inlined_call_operand.hbm [shape: f32[1,128,128], index: 3, kind: input, shape index: {}]
  %s4 = inlined_call_operand.vmem [shape: f32[1,1,128], index: 4, kind: input, shape index: {}]
  %s5 = inlined_call_operand.hbm [shape: f32[128,128], index: 5, kind: input, shape index: {}]
  %s6 = inlined_call_operand.vmem [shape: f32[1,128], index: 6, kind: input, shape index: {}]
  %s7 = inlined_call_operand.hbm [shape: f32[8,128], index: 7, kind: output, shape index: {}]
  %s8 = sld [smem:[#allocation0]]
  $region54: #{tpu_custom_call.1} parent=0
    _
  %s10 = ssub.s32 1, %s8
  %s11 = scalar_select 0, %s10, %s8
  $region1: #{tpu_custom_call.1} parent=0
    #allocation2 [shape = 'u8[8192]{0}', space=vmem, size = 0x2000, scoped, tag = 'input window, operand 0, single buffered']
    #allocation3 [shape = 's32[1]{0}', space=sflag, size = 0x4, scoped, tag = 'scoped memory for tpu_custom_call.1']
    #allocation4 [shape = 's32[1]{0}', space=sflag, size = 0x4, scoped, tag = 'scoped memory for tpu_custom_call.1']
    #allocation5 [shape = 'u8[65536]{0}', space=vmem, size = 0x10000, scoped, tag = 'input window, operand 1, single buffered']
    #allocation6 [shape = 's32[1]{0}', space=sflag, size = 0x4, scoped, tag = 'scoped memory for tpu_custom_call.1']
    #allocation7 [shape = 'u8[65536]{0}', space=vmem, size = 0x10000, scoped, tag = 'input window, operand 3, single buffered']
    #allocation8 [shape = 'u8[65536]{0}', space=vmem, size = 0x10000, scoped, tag = 'input window, operand 5, single buffered']
    #allocation9 [shape = 's32[1]{0}', space=sflag, size = 0x4, scoped, tag = 'scoped memory for tpu_custom_call.1']
    #allocation10 [shape = 'u8[8192]{0}', space=vmem, size = 0x2000, scoped, tag = 'output window, operand 0, single buffered']
    %12 = vsyncpa [#allocation3], 0
    %13 = vsyncpa [#allocation6], 0
    %14 = vsyncpa [#allocation9], 0
    %15 = vsyncpa [#allocation4], 0
    // Predicated region
    $region2: #{tpu_custom_call.1} parent=1 // pred_check
      _
    $region3: #{tpu_custom_call.1} parent=1 // pred_check_branch
      %17 = sbr.rel (0) target = $region5
    $region4: #{tpu_custom_call.1} parent=1 // pred_region
      %s19 = ssub.s32 256, 128
      %20 = vsyncadd [#allocation3], %s19
      %s21 = sshll.u32 [#allocation2], 4
      %s22 = int_to_ptr.vmem [resolvable:$true] %s21
      %27 = dma.hbm_to_vmem [thread:$0]  %s0, 128, %s22, [#allocation3], 128, 128, 8
    $region5: #{tpu_custom_call.1} parent=1 // pred_fallthru
      _
    // Predicated region
    $region6: #{tpu_custom_call.1} parent=1 // pred_check
      _
    $region7: #{tpu_custom_call.1} parent=1 // pred_check_branch
      %29 = sbr.rel (0) target = $region9
    $region8: #{tpu_custom_call.1} parent=1 // pred_region
      %s31 = ssub.s32 2048, 2048
      %32 = vsyncadd [#allocation6], %s31
      %s33 = sshll.u32 [#allocation5], 4
      %s34 = int_to_ptr.vmem [resolvable:$true] %s33
      %39 = dma.hbm_to_vmem [thread:$0]  %s1, 2048, %s34, [#allocation6], 128, 128, 8
    $region9: #{tpu_custom_call.1} parent=1 // pred_fallthru
      _
    // Predicated region
    $region10: #{tpu_custom_call.1} parent=1 // pred_check
      _
    $region11: #{tpu_custom_call.1} parent=1 // pred_check_branch
      %41 = sbr.rel (0) target = $region13
    $region12: #{tpu_custom_call.1} parent=1 // pred_region
      _
    $region13: #{tpu_custom_call.1} parent=1 // pred_fallthru
      _
    // Predicated region
    $region14: #{tpu_custom_call.1} parent=1 // pred_check
      _
    $region15: #{tpu_custom_call.1} parent=1 // pred_check_branch
      %43 = sbr.rel (0) target = $region17
    $region16: #{tpu_custom_call.1} parent=1 // pred_region
      %s45 = ssub.s32 2048, 2048
      %46 = vsyncadd [#allocation6], %s45
      %s47 = sshll.u32 [#allocation7], 4
      %s48 = int_to_ptr.vmem [resolvable:$true] %s47
      %53 = dma.hbm_to_vmem [thread:$0]  %s3, 2048, %s48, [#allocation6], 128, 128, 8
    $region17: #{tpu_custom_call.1} parent=1 // pred_fallthru
      _
    // Predicated region
    $region18: #{tpu_custom_call.1} parent=1 // pred_check
      _
    $region19: #{tpu_custom_call.1} parent=1 // pred_check_branch
      %55 = sbr.rel (0) target = $region21
    $region20: #{tpu_custom_call.1} parent=1 // pred_region
      _
    $region21: #{tpu_custom_call.1} parent=1 // pred_fallthru
      _
    // Predicated region
    $region22: #{tpu_custom_call.1} parent=1 // pred_check
      _
    $region23: #{tpu_custom_call.1} parent=1 // pred_check_branch
      %57 = sbr.rel (0) target = $region25
    $region24: #{tpu_custom_call.1} parent=1 // pred_region
      %s59 = ssub.s32 2048, 2048
      %60 = vsyncadd [#allocation9], %s59
      %s61 = sshll.u32 [#allocation8], 4
      %s62 = int_to_ptr.vmem [resolvable:$true] %s61
      %67 = dma.hbm_to_vmem [thread:$0]  %s5, 2048, %s62, [#allocation9], 128, 128, 8
    $region25: #{tpu_custom_call.1} parent=1 // pred_fallthru
      _
    // Predicated region
    $region26: #{tpu_custom_call.1} parent=1 // pred_check
      _
    $region27: #{tpu_custom_call.1} parent=1 // pred_check_branch
      %69 = sbr.rel (0) target = $region29
    $region28: #{tpu_custom_call.1} parent=1 // pred_region
      _
    $region29: #{tpu_custom_call.1} parent=1 // pred_fallthru
      _
    // Predicated region
    $region30: #{tpu_custom_call.1} parent=1 // pred_check
      _
    $region31: #{tpu_custom_call.1} parent=1 // pred_check_branch
      %71 = sbr.rel (0) target = $region33
    $region32: #{tpu_custom_call.1} parent=1 // pred_region
      %72 = dma.done [#allocation3], 256
    $region33: #{tpu_custom_call.1} parent=1 // pred_fallthru
      _
    // Predicated region
    $region34: #{tpu_custom_call.1} parent=1 // pred_check
      _
    $region35: #{tpu_custom_call.1} parent=1 // pred_check_branch
      %74 = sbr.rel (0) target = $region37
    $region36: #{tpu_custom_call.1} parent=1 // pred_region
      %75 = dma.done [#allocation6], 2048
    $region37: #{tpu_custom_call.1} parent=1 // pred_fallthru
      _
    // Predicated region
    $region38: #{tpu_custom_call.1} parent=1 // pred_check
      _
    $region39: #{tpu_custom_call.1} parent=1 // pred_check_branch
      %77 = sbr.rel (0) target = $region41
    $region40: #{tpu_custom_call.1} parent=1 // pred_region
      %78 = dma.done [#allocation6], 2048
    $region41: #{tpu_custom_call.1} parent=1 // pred_fallthru
      _
    // Predicated region
    $region42: #{tpu_custom_call.1} parent=1 // pred_check
      _
    $region43: #{tpu_custom_call.1} parent=1 // pred_check_branch
      %80 = sbr.rel (0) target = $region45
    $region44: #{tpu_custom_call.1} parent=1 // pred_region
      %81 = dma.done [#allocation9], 2048
    $region45: #{tpu_custom_call.1} parent=1 // pred_fallthru
      _
    %v82 = vld [vmem:[#allocation2] sm:$0xff]
    %v83 = vld [vmem:[#allocation2 + $0x8] sm:$0xff]
    %v84 = vld [vmem:[#allocation5] sm:$0xff]
    %v85 = vld [vmem:[#allocation5 + $0x8] sm:$0xff]
    %v86 = vld [vmem:[#allocation5 + $0x10] sm:$0xff]
    %v87 = vld [vmem:[#allocation5 + $0x18] sm:$0xff]
    %v88 = vld [vmem:[#allocation5 + $0x20] sm:$0xff]
    %v89 = vld [vmem:[#allocation5 + $0x28] sm:$0xff]
    %v90 = vld [vmem:[#allocation5 + $0x30] sm:$0xff]
    %v91 = vld [vmem:[#allocation5 + $0x38] sm:$0xff]
    %v92 = vld [vmem:[#allocation5 + $0x40] sm:$0xff]
    %v93 = vld [vmem:[#allocation5 + $0x48] sm:$0xff]
    %v94 = vld [vmem:[#allocation5 + $0x50] sm:$0xff]
    %v95 = vld [vmem:[#allocation5 + $0x58] sm:$0xff]
    %v96 = vld [vmem:[#allocation5 + $0x60] sm:$0xff]
    %v97 = vld [vmem:[#allocation5 + $0x68] sm:$0xff]
    %v98 = vld [vmem:[#allocation5 + $0x70] sm:$0xff]
    %v99 = vld [vmem:[#allocation5 + $0x78] sm:$0xff]
    %v100 = vld [vmem:[%s2] sm:$0x1]
    %v102 = vlaneseq
    %v103 = vshrl.u32 %v102, 7
    %v104 = vsub.s32 0, %v103
    %v105 = vrot.slane %v100, %v104
    %107 = vmatprep.subr.mxu0 0.0
    %108 = vmatpush1.msra.mxu0 %v84
    %109 = vmatprep.subr.mxu0 0.0
    %110 = vmatpush1.msra.mxu0 %v85
    %111 = vmatprep.subr.mxu0 0.0
    %112 = vmatpush1.msra.mxu0 %v86
    %113 = vmatprep.subr.mxu0 0.0
    %114 = vmatpush1.msra.mxu0 %v87
    %115 = vmatprep.subr.mxu0 0.0
    %116 = vmatpush1.msra.mxu0 %v88
    %117 = vmatprep.subr.mxu0 0.0
    %118 = vmatpush1.msra.mxu0 %v89
    %119 = vmatprep.subr.mxu0 0.0
    %120 = vmatpush1.msra.mxu0 %v90
    %121 = vmatprep.subr.mxu0 0.0
    %122 = vmatpush1.msra.mxu0 %v91
    %123 = vmatprep.subr.mxu0 0.0
    %124 = vmatpush1.msra.mxu0 %v92
    %125 = vmatprep.subr.mxu0 0.0
    %126 = vmatpush1.msra.mxu0 %v93
    %127 = vmatprep.subr.mxu0 0.0
    %128 = vmatpush1.msra.mxu0 %v94
    %129 = vmatprep.subr.mxu0 0.0
    %130 = vmatpush1.msra.mxu0 %v95
    %131 = vmatprep.subr.mxu0 0.0
    %132 = vmatpush1.msra.mxu0 %v96
    %133 = vmatprep.subr.mxu0 0.0
    %134 = vmatpush1.msra.mxu0 %v97
    %135 = vmatprep.subr.mxu0 0.0
    %136 = vmatpush1.msra.mxu0 %v98
    %137 = vmatprep.subr.mxu0 0.0
    %138 = vmatpush1.msra.mxu0 %v99
    %139 = vmatprep.subr.mxu0 0.0
    %140 = vmatpush1.msra.mxu0 0.0
    %141 = vmatprep.subr.mxu0 0.0
    %142 = vmatpush1.msra.mxu0 0.0
    %143 = vmatprep.subr.mxu0 0.0
    %144 = vmatpush1.msra.mxu0 0.0
    %145 = vmatprep.subr.mxu0 0.0
    %146 = vmatpush1.msra.mxu0 0.0
    %147 = vmatprep.subr.mxu0 0.0
    %148 = vmatpush1.msra.mxu0 0.0
    %149 = vmatprep.subr.mxu0 0.0
    %150 = vmatpush1.msra.mxu0 0.0
    %151 = vmatprep.subr.mxu0 0.0
    %152 = vmatpush1.msra.mxu0 0.0
    %153 = vmatprep.subr.mxu0 0.0
    %154 = vmatpush1.msra.mxu0 0.0
    %155 = vmatprep.subr.mxu0 0.0
    %156 = vmatpush1.msra.mxu0 0.0
    %157 = vmatprep.subr.mxu0 0.0
    %158 = vmatpush1.msra.mxu0 0.0
    %159 = vmatprep.subr.mxu0 0.0
    %160 = vmatpush1.msra.mxu0 0.0
    %161 = vmatprep.subr.mxu0 0.0
    %162 = vmatpush1.msra.mxu0 0.0
    %163 = vmatprep.subr.mxu0 0.0
    %164 = vmatpush1.msra.mxu0 0.0
    %165 = vmatprep.subr.mxu0 0.0
    %166 = vmatpush1.msra.mxu0 0.0
    %167 = vmatprep.subr.mxu0 0.0
    %168 = vmatpush1.msra.mxu0 0.0
    %169 = vmatprep.subr.mxu0 0.0
    %170 = vmatpush1.msra.mxu0 0.0
    %171 = vmatprep.mubr.f32.mxu0 0.0
    %172 = vmatmul.mubr.f32.gmra.mrb[0].mxu0 %v82
    %v173 = vpop.f32.mrb[0].mxu0
    %v174 = vadd.f32 %v105, %v173
    %v175 = vpop.f32.mrb[0].mxu0
    %176 = vmatprep.mubr.f32.mxu0 0.0
    %177 = vmatmul.mubr.f32.gmra.mrb[0].mxu0 %v83
    %v178 = vpop.f32.mrb[0].mxu0
    %v179 = vadd.f32 %v105, %v178
    %v180 = vpop.f32.mrb[0].mxu0
    %181 = vdwg.mxu0
    %v182 = vmax.f32 %v174, 0.0
    %v183 = vmax.f32 %v179, 0.0
    %v184 = vld [vmem:[#allocation7] sm:$0xff]
    %v185 = vld [vmem:[#allocation7 + $0x8] sm:$0xff]
    %v186 = vld [vmem:[#allocation7 + $0x10] sm:$0xff]
    %v187 = vld [vmem:[#allocation7 + $0x18] sm:$0xff]
    %v188 = vld [vmem:[#allocation7 + $0x20] sm:$0xff]
    %v189 = vld [vmem:[#allocation7 + $0x28] sm:$0xff]
    %v190 = vld [vmem:[#allocation7 + $0x30] sm:$0xff]
    %v191 = vld [vmem:[#allocation7 + $0x38] sm:$0xff]
    %v192 = vld [vmem:[#allocation7 + $0x40] sm:$0xff]
    %v193 = vld [vmem:[#allocation7 + $0x48] sm:$0xff]
    %v194 = vld [vmem:[#allocation7 + $0x50] sm:$0xff]
    %v195 = vld [vmem:[#allocation7 + $0x58] sm:$0xff]
    %v196 = vld [vmem:[#allocation7 + $0x60] sm:$0xff]
    %v197 = vld [vmem:[#allocation7 + $0x68] sm:$0xff]
    %v198 = vld [vmem:[#allocation7 + $0x70] sm:$0xff]
    %v199 = vld [vmem:[#allocation7 + $0x78] sm:$0xff]
    %v200 = vld [vmem:[%s4] sm:$0x1]
    %v202 = vlaneseq
    %v203 = vshrl.u32 %v202, 7
    %v204 = vsub.s32 0, %v203
    %v205 = vrot.slane %v200, %v204
    %207 = vmatprep.subr.mxu0 0.0
    %208 = vmatpush1.msra.mxu0 %v184
    %209 = vmatprep.subr.mxu0 0.0
    %210 = vmatpush1.msra.mxu0 %v185
    %211 = vmatprep.subr.mxu0 0.0
    %212 = vmatpush1.msra.mxu0 %v186
    %213 = vmatprep.subr.mxu0 0.0
    %214 = vmatpush1.msra.mxu0 %v187
    %215 = vmatprep.subr.mxu0 0.0
    %216 = vmatpush1.msra.mxu0 %v188
    %217 = vmatprep.subr.mxu0 0.0
    %218 = vmatpush1.msra.mxu0 %v189
    %219 = vmatprep.subr.mxu0 0.0
    %220 = vmatpush1.msra.mxu0 %v190
    %221 = vmatprep.subr.mxu0 0.0
    %222 = vmatpush1.msra.mxu0 %v191
    %223 = vmatprep.subr.mxu0 0.0
    %224 = vmatpush1.msra.mxu0 %v192
    %225 = vmatprep.subr.mxu0 0.0
    %226 = vmatpush1.msra.mxu0 %v193
    %227 = vmatprep.subr.mxu0 0.0
    %228 = vmatpush1.msra.mxu0 %v194
    %229 = vmatprep.subr.mxu0 0.0
    %230 = vmatpush1.msra.mxu0 %v195
    %231 = vmatprep.subr.mxu0 0.0
    %232 = vmatpush1.msra.mxu0 %v196
    %233 = vmatprep.subr.mxu0 0.0
    %234 = vmatpush1.msra.mxu0 %v197
    %235 = vmatprep.subr.mxu0 0.0
    %236 = vmatpush1.msra.mxu0 %v198
    %237 = vmatprep.subr.mxu0 0.0
    %238 = vmatpush1.msra.mxu0 %v199
    %239 = vmatprep.subr.mxu0 0.0
    %240 = vmatpush1.msra.mxu0 0.0
    %241 = vmatprep.subr.mxu0 0.0
    %242 = vmatpush1.msra.mxu0 0.0
    %243 = vmatprep.subr.mxu0 0.0
    %244 = vmatpush1.msra.mxu0 0.0
    %245 = vmatprep.subr.mxu0 0.0
    %246 = vmatpush1.msra.mxu0 0.0
    %247 = vmatprep.subr.mxu0 0.0
    %248 = vmatpush1.msra.mxu0 0.0
    %249 = vmatprep.subr.mxu0 0.0
    %250 = vmatpush1.msra.mxu0 0.0
    %251 = vmatprep.subr.mxu0 0.0
    %252 = vmatpush1.msra.mxu0 0.0
    %253 = vmatprep.subr.mxu0 0.0
    %254 = vmatpush1.msra.mxu0 0.0
    %255 = vmatprep.subr.mxu0 0.0
    %256 = vmatpush1.msra.mxu0 0.0
    %257 = vmatprep.subr.mxu0 0.0
    %258 = vmatpush1.msra.mxu0 0.0
    %259 = vmatprep.subr.mxu0 0.0
    %260 = vmatpush1.msra.mxu0 0.0
    %261 = vmatprep.subr.mxu0 0.0
    %262 = vmatpush1.msra.mxu0 0.0
    %263 = vmatprep.subr.mxu0 0.0
    %264 = vmatpush1.msra.mxu0 0.0
    %265 = vmatprep.subr.mxu0 0.0
    %266 = vmatpush1.msra.mxu0 0.0
    %267 = vmatprep.subr.mxu0 0.0
    %268 = vmatpush1.msra.mxu0 0.0
    %269 = vmatprep.subr.mxu0 0.0
    %270 = vmatpush1.msra.mxu0 0.0
    %271 = vmatprep.mubr.f32.mxu0 0.0
    %272 = vmatmul.mubr.f32.gmra.mrb[0].mxu0 %v182
    %v273 = vpop.f32.mrb[0].mxu0
    %v274 = vadd.f32 %v205, %v273
    %v275 = vpop.f32.mrb[0].mxu0
    %276 = vmatprep.mubr.f32.mxu0 0.0
    %277 = vmatmul.mubr.f32.gmra.mrb[0].mxu0 %v183
    %v278 = vpop.f32.mrb[0].mxu0
    %v279 = vadd.f32 %v205, %v278
    %v280 = vpop.f32.mrb[0].mxu0
    %281 = vdwg.mxu0
    %v282 = vmax.f32 %v274, 0.0
    %v283 = vmax.f32 %v279, 0.0
    %v284 = vmin.f32 %v282, 1.0
    %v285 = vmin.f32 %v283, 1.0
    %v286 = vld [vmem:[#allocation8] sm:$0xff]
    %v287 = vld [vmem:[#allocation8 + $0x8] sm:$0xff]
    %v288 = vld [vmem:[#allocation8 + $0x10] sm:$0xff]
    %v289 = vld [vmem:[#allocation8 + $0x18] sm:$0xff]
    %v290 = vld [vmem:[#allocation8 + $0x20] sm:$0xff]
    %v291 = vld [vmem:[#allocation8 + $0x28] sm:$0xff]
    %v292 = vld [vmem:[#allocation8 + $0x30] sm:$0xff]
    %v293 = vld [vmem:[#allocation8 + $0x38] sm:$0xff]
    %v294 = vld [vmem:[#allocation8 + $0x40] sm:$0xff]
    %v295 = vld [vmem:[#allocation8 + $0x48] sm:$0xff]
    %v296 = vld [vmem:[#allocation8 + $0x50] sm:$0xff]
    %v297 = vld [vmem:[#allocation8 + $0x58] sm:$0xff]
    %v298 = vld [vmem:[#allocation8 + $0x60] sm:$0xff]
    %v299 = vld [vmem:[#allocation8 + $0x68] sm:$0xff]
    %v300 = vld [vmem:[#allocation8 + $0x70] sm:$0xff]
    %v301 = vld [vmem:[#allocation8 + $0x78] sm:$0xff]
    %v302 = vld [vmem:[%s6] sm:$0x1]
    %v304 = vlaneseq
    %v305 = vshrl.u32 %v304, 7
    %v306 = vsub.s32 0, %v305
    %v307 = vrot.slane %v302, %v306
    %309 = vmatprep.subr.mxu0 0.0
    %310 = vmatpush1.msra.mxu0 %v286
    %311 = vmatprep.subr.mxu0 0.0
    %312 = vmatpush1.msra.mxu0 %v287
    %313 = vmatprep.subr.mxu0 0.0
    %314 = vmatpush1.msra.mxu0 %v288
    %315 = vmatprep.subr.mxu0 0.0
    %316 = vmatpush1.msra.mxu0 %v289
    %317 = vmatprep.subr.mxu0 0.0
    %318 = vmatpush1.msra.mxu0 %v290
    %319 = vmatprep.subr.mxu0 0.0
    %320 = vmatpush1.msra.mxu0 %v291
    %321 = vmatprep.subr.mxu0 0.0
    %322 = vmatpush1.msra.mxu0 %v292
    %323 = vmatprep.subr.mxu0 0.0
    %324 = vmatpush1.msra.mxu0 %v293
    %325 = vmatprep.subr.mxu0 0.0
    %326 = vmatpush1.msra.mxu0 %v294
    %327 = vmatprep.subr.mxu0 0.0
    %328 = vmatpush1.msra.mxu0 %v295
    %329 = vmatprep.subr.mxu0 0.0
    %330 = vmatpush1.msra.mxu0 %v296
    %331 = vmatprep.subr.mxu0 0.0
    %332 = vmatpush1.msra.mxu0 %v297
    %333 = vmatprep.subr.mxu0 0.0
    %334 = vmatpush1.msra.mxu0 %v298
    %335 = vmatprep.subr.mxu0 0.0
    %336 = vmatpush1.msra.mxu0 %v299
    %337 = vmatprep.subr.mxu0 0.0
    %338 = vmatpush1.msra.mxu0 %v300
    %339 = vmatprep.subr.mxu0 0.0
    %340 = vmatpush1.msra.mxu0 %v301
    %341 = vmatprep.subr.mxu0 0.0
    %342 = vmatpush1.msra.mxu0 0.0
    %343 = vmatprep.subr.mxu0 0.0
    %344 = vmatpush1.msra.mxu0 0.0
    %345 = vmatprep.subr.mxu0 0.0
    %346 = vmatpush1.msra.mxu0 0.0
    %347 = vmatprep.subr.mxu0 0.0
    %348 = vmatpush1.msra.mxu0 0.0
    %349 = vmatprep.subr.mxu0 0.0
    %350 = vmatpush1.msra.mxu0 0.0
    %351 = vmatprep.subr.mxu0 0.0
    %352 = vmatpush1.msra.mxu0 0.0
    %353 = vmatprep.subr.mxu0 0.0
    %354 = vmatpush1.msra.mxu0 0.0
    %355 = vmatprep.subr.mxu0 0.0
    %356 = vmatpush1.msra.mxu0 0.0
    %357 = vmatprep.subr.mxu0 0.0
    %358 = vmatpush1.msra.mxu0 0.0
    %359 = vmatprep.subr.mxu0 0.0
    %360 = vmatpush1.msra.mxu0 0.0
    %361 = vmatprep.subr.mxu0 0.0
    %362 = vmatpush1.msra.mxu0 0.0
    %363 = vmatprep.subr.mxu0 0.0
    %364 = vmatpush1.msra.mxu0 0.0
    %365 = vmatprep.subr.mxu0 0.0
    %366 = vmatpush1.msra.mxu0 0.0
    %367 = vmatprep.subr.mxu0 0.0
    %368 = vmatpush1.msra.mxu0 0.0
    %369 = vmatprep.subr.mxu0 0.0
    %370 = vmatpush1.msra.mxu0 0.0
    %371 = vmatprep.subr.mxu0 0.0
    %372 = vmatpush1.msra.mxu0 0.0
    %373 = vmatprep.mubr.f32.mxu0 0.0
    %374 = vmatmul.mubr.f32.gmra.mrb[0].mxu0 %v284
    %v375 = vpop.f32.mrb[0].mxu0
    %v376 = vadd.f32 %v307, %v375
    %v377 = vpop.f32.mrb[0].mxu0
    %378 = vmatprep.mubr.f32.mxu0 0.0
    %379 = vmatmul.mubr.f32.gmra.mrb[0].mxu0 %v285
    %v380 = vpop.f32.mrb[0].mxu0
    %v381 = vadd.f32 %v307, %v380
    %v382 = vpop.f32.mrb[0].mxu0
    %383 = vdwg.mxu0
    %384 = vst [vmem:[#allocation10] sm:$0xff] %v376
    %385 = vst [vmem:[#allocation10 + $0x8] sm:$0xff] %v381
    // Predicated region
    $region46: #{tpu_custom_call.1} parent=1 // pred_check
      _
    $region47: #{tpu_custom_call.1} parent=1 // pred_check_branch
      %387 = sbr.rel (0) target = $region49
    $region48: #{tpu_custom_call.1} parent=1 // pred_region
      %s389 = ssub.s32 256, 128
      %390 = vsyncadd [#allocation4], %s389
      %s391 = sshll.u32 [#allocation10], 4
      %s392 = int_to_ptr.vmem [resolvable:$true] %s391
      %397 = dma.vmem_to_hbm [thread:$0]  %s392, 128, %s7, [#allocation4], 128, 128, 8
    $region49: #{tpu_custom_call.1} parent=1 // pred_fallthru
      _
    // Predicated region
    $region50: #{tpu_custom_call.1} parent=1 // pred_check
      _
    $region51: #{tpu_custom_call.1} parent=1 // pred_check_branch
      %399 = sbr.rel (0) target = $region53
    $region52: #{tpu_custom_call.1} parent=1 // pred_region
      %400 = dma.done [#allocation4], 256
    $region53: #{tpu_custom_call.1} parent=1 // pred_fallthru
      _
    %401 = vsyncpa [#allocation3], 1
    %402 = vsyncpa [#allocation6], 1
    %403 = vsyncpa [#allocation9], 1
    %404 = vsyncpa [#allocation4], 1

// kernel: tpu_custom_call.1
$region0: #{tpu_custom_call.1}
  #allocation0 [shape = 'u32[]', space=smem, size = 0x4, offset = 0x4, fixed_abs, tag = 'smem constant byte address 0x4 - core index']
  #allocation1 [shape = 'u32[144,128]{1,0:T(1,128)}', space=vmem, size = 0x12000, scoped, tag = 'internal scratch']
  %s0 = inlined_call_operand.hbm [shape: f32[8,128], index: 0, kind: input, shape index: {}]
  %s1 = inlined_call_operand.hbm [shape: f32[128,128], index: 1, kind: input, shape index: {}]
  %s2 = inlined_call_operand.vmem [shape: f32[1,128], index: 2, kind: input, shape index: {}]
  %s3 = inlined_call_operand.hbm [shape: f32[1,128,128], index: 3, kind: input, shape index: {}]
  %s4 = inlined_call_operand.vmem [shape: f32[1,1,128], index: 4, kind: input, shape index: {}]
  %s5 = inlined_call_operand.hbm [shape: f32[128,128], index: 5, kind: input, shape index: {}]
  %s6 = inlined_call_operand.vmem [shape: f32[1,128], index: 6, kind: input, shape index: {}]
  %s7 = inlined_call_operand.hbm [shape: f32[8,128], index: 7, kind: output, shape index: {}]
  %s8 = sld [smem:[#allocation0]]
  $region54: #{tpu_custom_call.1} parent=0
    _
  %s10 = ssub.s32 1, %s8
  %s11 = scalar_select 0, %s10, %s8
  $region1: #{tpu_custom_call.1} parent=0
    #allocation2 [shape = 'u8[8192]{0}', space=vmem, size = 0x2000, scoped, tag = 'input window, operand 0, single buffered']
    #allocation3 [shape = 's32[1]{0}', space=sflag, size = 0x4, scoped, tag = 'scoped memory for tpu_custom_call.1']
    #allocation4 [shape = 's32[1]{0}', space=sflag, size = 0x4, scoped, tag = 'scoped memory for tpu_custom_call.1']
    #allocation5 [shape = 'u8[65536]{0}', space=vmem, size = 0x10000, scoped, tag = 'input window, operand 1, single buffered']
    #allocation6 [shape = 's32[1]{0}', space=sflag, size = 0x4, scoped, tag = 'scoped memory for tpu_custom_call.1']
    #allocation7 [shape = 'u8[65536]{0}', space=vmem, size = 0x10000, scoped, tag = 'input window, operand 3, single buffered']
    #allocation8 [shape = 'u8[65536]{0}', space=vmem, size = 0x10000, scoped, tag = 'input window, operand 5, single buffered']
    #allocation9 [shape = 's32[1]{0}', space=sflag, size = 0x4, scoped, tag = 'scoped memory for tpu_custom_call.1']
    #allocation10 [shape = 'u8[8192]{0}', space=vmem, size = 0x2000, scoped, tag = 'output window, operand 0, single buffered']
    %12 = vsyncpa [#allocation3], 0
    %13 = vsyncpa [#allocation6], 0
    %14 = vsyncpa [#allocation9], 0
    %15 = vsyncpa [#allocation4], 0
    // Predicated region
    $region2: #{tpu_custom_call.1} parent=1 // pred_check
      _
    $region3: #{tpu_custom_call.1} parent=1 // pred_check_branch
      %17 = sbr.rel (0) target = $region5
    $region4: #{tpu_custom_call.1} parent=1 // pred_region
      %s19 = ssub.s32 256, 128
      %20 = vsyncadd [#allocation3], %s19
      %s21 = sshll.u32 [#allocation2], 4
      %s22 = int_to_ptr.vmem [resolvable:$true] %s21
      %27 = dma.hbm_to_vmem [thread:$0]  %s0, 128, %s22, [#allocation3], 128, 128, 8
    $region5: #{tpu_custom_call.1} parent=1 // pred_fallthru
      _
    // Predicated region
    $region6: #{tpu_custom_call.1} parent=1 // pred_check
      _
    $region7: #{tpu_custom_call.1} parent=1 // pred_check_branch
      %29 = sbr.rel (0) target = $region9
    $region8: #{tpu_custom_call.1} parent=1 // pred_region
      %s31 = ssub.s32 2048, 2048
      %32 = vsyncadd [#allocation6], %s31
      %s33 = sshll.u32 [#allocation5], 4
      %s34 = int_to_ptr.vmem [resolvable:$true] %s33
      %39 = dma.hbm_to_vmem [thread:$0]  %s1, 2048, %s34, [#allocation6], 128, 128, 8
    $region9: #{tpu_custom_call.1} parent=1 // pred_fallthru
      _
    // Predicated region
    $region10: #{tpu_custom_call.1} parent=1 // pred_check
      _
    $region11: #{tpu_custom_call.1} parent=1 // pred_check_branch
      %41 = sbr.rel (0) target = $region13
    $region12: #{tpu_custom_call.1} parent=1 // pred_region
      _
    $region13: #{tpu_custom_call.1} parent=1 // pred_fallthru
      _
    // Predicated region
    $region14: #{tpu_custom_call.1} parent=1 // pred_check
      _
    $region15: #{tpu_custom_call.1} parent=1 // pred_check_branch
      %43 = sbr.rel (0) target = $region17
    $region16: #{tpu_custom_call.1} parent=1 // pred_region
      %s45 = ssub.s32 2048, 2048
      %46 = vsyncadd [#allocation6], %s45
      %s47 = sshll.u32 [#allocation7], 4
      %s48 = int_to_ptr.vmem [resolvable:$true] %s47
      %53 = dma.hbm_to_vmem [thread:$0]  %s3, 2048, %s48, [#allocation6], 128, 128, 8
    $region17: #{tpu_custom_call.1} parent=1 // pred_fallthru
      _
    // Predicated region
    $region18: #{tpu_custom_call.1} parent=1 // pred_check
      _
    $region19: #{tpu_custom_call.1} parent=1 // pred_check_branch
      %55 = sbr.rel (0) target = $region21
    $region20: #{tpu_custom_call.1} parent=1 // pred_region
      _
    $region21: #{tpu_custom_call.1} parent=1 // pred_fallthru
      _
    // Predicated region
    $region22: #{tpu_custom_call.1} parent=1 // pred_check
      _
    $region23: #{tpu_custom_call.1} parent=1 // pred_check_branch
      %57 = sbr.rel (0) target = $region25
    $region24: #{tpu_custom_call.1} parent=1 // pred_region
      %s59 = ssub.s32 2048, 2048
      %60 = vsyncadd [#allocation9], %s59
      %s61 = sshll.u32 [#allocation8], 4
      %s62 = int_to_ptr.vmem [resolvable:$true] %s61
      %67 = dma.hbm_to_vmem [thread:$0]  %s5, 2048, %s62, [#allocation9], 128, 128, 8
    $region25: #{tpu_custom_call.1} parent=1 // pred_fallthru
      _
    // Predicated region
    $region26: #{tpu_custom_call.1} parent=1 // pred_check
      _
    $region27: #{tpu_custom_call.1} parent=1 // pred_check_branch
      %69 = sbr.rel (0) target = $region29
    $region28: #{tpu_custom_call.1} parent=1 // pred_region
      _
    $region29: #{tpu_custom_call.1} parent=1 // pred_fallthru
      _
    // Predicated region
    $region30: #{tpu_custom_call.1} parent=1 // pred_check
      _
    $region31: #{tpu_custom_call.1} parent=1 // pred_check_branch
      %71 = sbr.rel (0) target = $region33
    $region32: #{tpu_custom_call.1} parent=1 // pred_region
      %72 = dma.done [#allocation3], 256
    $region33: #{tpu_custom_call.1} parent=1 // pred_fallthru
      _
    // Predicated region
    $region34: #{tpu_custom_call.1} parent=1 // pred_check
      _
    $region35: #{tpu_custom_call.1} parent=1 // pred_check_branch
      %74 = sbr.rel (0) target = $region37
    $region36: #{tpu_custom_call.1} parent=1 // pred_region
      %75 = dma.done [#allocation6], 2048
    $region37: #{tpu_custom_call.1} parent=1 // pred_fallthru
      _
    // Predicated region
    $region38: #{tpu_custom_call.1} parent=1 // pred_check
      _
    $region39: #{tpu_custom_call.1} parent=1 // pred_check_branch
      %77 = sbr.rel (0) target = $region41
    $region40: #{tpu_custom_call.1} parent=1 // pred_region
      %78 = dma.done [#allocation6], 2048
    $region41: #{tpu_custom_call.1} parent=1 // pred_fallthru
      _
    // Predicated region
    $region42: #{tpu_custom_call.1} parent=1 // pred_check
      _
    $region43: #{tpu_custom_call.1} parent=1 // pred_check_branch
      %80 = sbr.rel (0) target = $region45
    $region44: #{tpu_custom_call.1} parent=1 // pred_region
      %81 = dma.done [#allocation9], 2048
    $region45: #{tpu_custom_call.1} parent=1 // pred_fallthru
      _
    %v82 = vld [vmem:[#allocation2] sm:$0xff]
    %v83 = vld [vmem:[#allocation2 + $0x8] sm:$0xff]
    %v84 = vld [vmem:[#allocation5] sm:$0xff]
    %v85 = vld [vmem:[#allocation5 + $0x8] sm:$0xff]
    %v86 = vld [vmem:[#allocation5 + $0x10] sm:$0xff]
    %v87 = vld [vmem:[#allocation5 + $0x18] sm:$0xff]
    %v88 = vld [vmem:[#allocation5 + $0x20] sm:$0xff]
    %v89 = vld [vmem:[#allocation5 + $0x28] sm:$0xff]
    %v90 = vld [vmem:[#allocation5 + $0x30] sm:$0xff]
    %v91 = vld [vmem:[#allocation5 + $0x38] sm:$0xff]
    %v92 = vld [vmem:[#allocation5 + $0x40] sm:$0xff]
    %v93 = vld [vmem:[#allocation5 + $0x48] sm:$0xff]
    %v94 = vld [vmem:[#allocation5 + $0x50] sm:$0xff]
    %v95 = vld [vmem:[#allocation5 + $0x58] sm:$0xff]
    %v96 = vld [vmem:[#allocation5 + $0x60] sm:$0xff]
    %v97 = vld [vmem:[#allocation5 + $0x68] sm:$0xff]
    %v98 = vld [vmem:[#allocation5 + $0x70] sm:$0xff]
    %v99 = vld [vmem:[#allocation5 + $0x78] sm:$0xff]
    %v100 = vld [vmem:[%s2] sm:$0x1]
    %v102 = vlaneseq
    %v103 = vshrl.u32 %v102, 7
    %v104 = vsub.s32 0, %v103
    %v105 = vrot.slane %v100, %v104
    %107 = vmatprep.subr.mxu0 0.0
    %108 = vmatpush1.msra.mxu0 %v84
    %109 = vmatprep.subr.mxu0 0.0
    %110 = vmatpush1.msra.mxu0 %v85
    %111 = vmatprep.subr.mxu0 0.0
    %112 = vmatpush1.msra.mxu0 %v86
    %113 = vmatprep.subr.mxu0 0.0
    %114 = vmatpush1.msra.mxu0 %v87
    %115 = vmatprep.subr.mxu0 0.0
    %116 = vmatpush1.msra.mxu0 %v88
    %117 = vmatprep.subr.mxu0 0.0
    %118 = vmatpush1.msra.mxu0 %v89
    %119 = vmatprep.subr.mxu0 0.0
    %120 = vmatpush1.msra.mxu0 %v90
    %121 = vmatprep.subr.mxu0 0.0
    %122 = vmatpush1.msra.mxu0 %v91
    %123 = vmatprep.subr.mxu0 0.0
    %124 = vmatpush1.msra.mxu0 %v92
    %125 = vmatprep.subr.mxu0 0.0
    %126 = vmatpush1.msra.mxu0 %v93
    %127 = vmatprep.subr.mxu0 0.0
    %128 = vmatpush1.msra.mxu0 %v94
    %129 = vmatprep.subr.mxu0 0.0
    %130 = vmatpush1.msra.mxu0 %v95
    %131 = vmatprep.subr.mxu0 0.0
    %132 = vmatpush1.msra.mxu0 %v96
    %133 = vmatprep.subr.mxu0 0.0
    %134 = vmatpush1.msra.mxu0 %v97
    %135 = vmatprep.subr.mxu0 0.0
    %136 = vmatpush1.msra.mxu0 %v98
    %137 = vmatprep.subr.mxu0 0.0
    %138 = vmatpush1.msra.mxu0 %v99
    %139 = vmatprep.subr.mxu0 0.0
    %140 = vmatpush1.msra.mxu0 0.0
    %141 = vmatprep.subr.mxu0 0.0
    %142 = vmatpush1.msra.mxu0 0.0
    %143 = vmatprep.subr.mxu0 0.0
    %144 = vmatpush1.msra.mxu0 0.0
    %145 = vmatprep.subr.mxu0 0.0
    %146 = vmatpush1.msra.mxu0 0.0
    %147 = vmatprep.subr.mxu0 0.0
    %148 = vmatpush1.msra.mxu0 0.0
    %149 = vmatprep.subr.mxu0 0.0
    %150 = vmatpush1.msra.mxu0 0.0
    %151 = vmatprep.subr.mxu0 0.0
    %152 = vmatpush1.msra.mxu0 0.0
    %153 = vmatprep.subr.mxu0 0.0
    %154 = vmatpush1.msra.mxu0 0.0
    %155 = vmatprep.subr.mxu0 0.0
    %156 = vmatpush1.msra.mxu0 0.0
    %157 = vmatprep.subr.mxu0 0.0
    %158 = vmatpush1.msra.mxu0 0.0
    %159 = vmatprep.subr.mxu0 0.0
    %160 = vmatpush1.msra.mxu0 0.0
    %161 = vmatprep.subr.mxu0 0.0
    %162 = vmatpush1.msra.mxu0 0.0
    %163 = vmatprep.subr.mxu0 0.0
    %164 = vmatpush1.msra.mxu0 0.0
    %165 = vmatprep.subr.mxu0 0.0
    %166 = vmatpush1.msra.mxu0 0.0
    %167 = vmatprep.subr.mxu0 0.0
    %168 = vmatpush1.msra.mxu0 0.0
    %169 = vmatprep.subr.mxu0 0.0
    %170 = vmatpush1.msra.mxu0 0.0
    %171 = vmatprep.mubr.f32.mxu0 0.0
    %172 = vmatmul.mubr.f32.gmra.mrb[0].mxu0 %v82
    %v173 = vpop.f32.mrb[0].mxu0
    %v174 = vadd.f32 %v105, %v173
    %v175 = vpop.f32.mrb[0].mxu0
    %176 = vmatprep.mubr.f32.mxu0 0.0
    %177 = vmatmul.mubr.f32.gmra.mrb[0].mxu0 %v83
    %v178 = vpop.f32.mrb[0].mxu0
    %v179 = vadd.f32 %v105, %v178
    %v180 = vpop.f32.mrb[0].mxu0
    %181 = vdwg.mxu0
    %v182 = vmax.f32 %v174, 0.0
    %v183 = vmax.f32 %v179, 0.0
    %v184 = vld [vmem:[#allocation7] sm:$0xff]
    %v185 = vld [vmem:[#allocation7 + $0x8] sm:$0xff]
    %v186 = vld [vmem:[#allocation7 + $0x10] sm:$0xff]
    %v187 = vld [vmem:[#allocation7 + $0x18] sm:$0xff]
    %v188 = vld [vmem:[#allocation7 + $0x20] sm:$0xff]
    %v189 = vld [vmem:[#allocation7 + $0x28] sm:$0xff]
    %v190 = vld [vmem:[#allocation7 + $0x30] sm:$0xff]
    %v191 = vld [vmem:[#allocation7 + $0x38] sm:$0xff]
    %v192 = vld [vmem:[#allocation7 + $0x40] sm:$0xff]
    %v193 = vld [vmem:[#allocation7 + $0x48] sm:$0xff]
    %v194 = vld [vmem:[#allocation7 + $0x50] sm:$0xff]
    %v195 = vld [vmem:[#allocation7 + $0x58] sm:$0xff]
    %v196 = vld [vmem:[#allocation7 + $0x60] sm:$0xff]
    %v197 = vld [vmem:[#allocation7 + $0x68] sm:$0xff]
    %v198 = vld [vmem:[#allocation7 + $0x70] sm:$0xff]
    %v199 = vld [vmem:[#allocation7 + $0x78] sm:$0xff]
    %v200 = vld [vmem:[%s4] sm:$0x1]
    %v202 = vlaneseq
    %v203 = vshrl.u32 %v202, 7
    %v204 = vsub.s32 0, %v203
    %v205 = vrot.slane %v200, %v204
    %207 = vmatprep.subr.mxu0 0.0
    %208 = vmatpush1.msra.mxu0 %v184
    %209 = vmatprep.subr.mxu0 0.0
    %210 = vmatpush1.msra.mxu0 %v185
    %211 = vmatprep.subr.mxu0 0.0
    %212 = vmatpush1.msra.mxu0 %v186
    %213 = vmatprep.subr.mxu0 0.0
    %214 = vmatpush1.msra.mxu0 %v187
    %215 = vmatprep.subr.mxu0 0.0
    %216 = vmatpush1.msra.mxu0 %v188
    %217 = vmatprep.subr.mxu0 0.0
    %218 = vmatpush1.msra.mxu0 %v189
    %219 = vmatprep.subr.mxu0 0.0
    %220 = vmatpush1.msra.mxu0 %v190
    %221 = vmatprep.subr.mxu0 0.0
    %222 = vmatpush1.msra.mxu0 %v191
    %223 = vmatprep.subr.mxu0 0.0
    %224 = vmatpush1.msra.mxu0 %v192
    %225 = vmatprep.subr.mxu0 0.0
    %226 = vmatpush1.msra.mxu0 %v193
    %227 = vmatprep.subr.mxu0 0.0
    %228 = vmatpush1.msra.mxu0 %v194
    %229 = vmatprep.subr.mxu0 0.0
    %230 = vmatpush1.msra.mxu0 %v195
    %231 = vmatprep.subr.mxu0 0.0
    %232 = vmatpush1.msra.mxu0 %v196
    %233 = vmatprep.subr.mxu0 0.0
    %234 = vmatpush1.msra.mxu0 %v197
    %235 = vmatprep.subr.mxu0 0.0
    %236 = vmatpush1.msra.mxu0 %v198
    %237 = vmatprep.subr.mxu0 0.0
    %238 = vmatpush1.msra.mxu0 %v199
    %239 = vmatprep.subr.mxu0 0.0
    %240 = vmatpush1.msra.mxu0 0.0
    %241 = vmatprep.subr.mxu0 0.0
    %242 = vmatpush1.msra.mxu0 0.0
    %243 = vmatprep.subr.mxu0 0.0
    %244 = vmatpush1.msra.mxu0 0.0
    %245 = vmatprep.subr.mxu0 0.0
    %246 = vmatpush1.msra.mxu0 0.0
    %247 = vmatprep.subr.mxu0 0.0
    %248 = vmatpush1.msra.mxu0 0.0
    %249 = vmatprep.subr.mxu0 0.0
    %250 = vmatpush1.msra.mxu0 0.0
    %251 = vmatprep.subr.mxu0 0.0
    %252 = vmatpush1.msra.mxu0 0.0
    %253 = vmatprep.subr.mxu0 0.0
    %254 = vmatpush1.msra.mxu0 0.0
    %255 = vmatprep.subr.mxu0 0.0
    %256 = vmatpush1.msra.mxu0 0.0
    %257 = vmatprep.subr.mxu0 0.0
    %258 = vmatpush1.msra.mxu0 0.0
    %259 = vmatprep.subr.mxu0 0.0
    %260 = vmatpush1.msra.mxu0 0.0
    %261 = vmatprep.subr.mxu0 0.0
    %262 = vmatpush1.msra.mxu0 0.0
    %263 = vmatprep.subr.mxu0 0.0
    %264 = vmatpush1.msra.mxu0 0.0
    %265 = vmatprep.subr.mxu0 0.0
    %266 = vmatpush1.msra.mxu0 0.0
    %267 = vmatprep.subr.mxu0 0.0
    %268 = vmatpush1.msra.mxu0 0.0
    %269 = vmatprep.subr.mxu0 0.0
    %270 = vmatpush1.msra.mxu0 0.0
    %271 = vmatprep.mubr.f32.mxu0 0.0
    %272 = vmatmul.mubr.f32.gmra.mrb[0].mxu0 %v182
    %v273 = vpop.f32.mrb[0].mxu0
    %v274 = vadd.f32 %v205, %v273
    %v275 = vpop.f32.mrb[0].mxu0
    %276 = vmatprep.mubr.f32.mxu0 0.0
    %277 = vmatmul.mubr.f32.gmra.mrb[0].mxu0 %v183
    %v278 = vpop.f32.mrb[0].mxu0
    %v279 = vadd.f32 %v205, %v278
    %v280 = vpop.f32.mrb[0].mxu0
    %281 = vdwg.mxu0
    %v282 = vmax.f32 %v274, 0.0
    %v283 = vmax.f32 %v279, 0.0
    %v284 = vmin.f32 %v282, 1.0
    %v285 = vmin.f32 %v283, 1.0
    %v286 = vld [vmem:[#allocation8] sm:$0xff]
    %v287 = vld [vmem:[#allocation8 + $0x8] sm:$0xff]
    %v288 = vld [vmem:[#allocation8 + $0x10] sm:$0xff]
    %v289 = vld [vmem:[#allocation8 + $0x18] sm:$0xff]
    %v290 = vld [vmem:[#allocation8 + $0x20] sm:$0xff]
    %v291 = vld [vmem:[#allocation8 + $0x28] sm:$0xff]
    %v292 = vld [vmem:[#allocation8 + $0x30] sm:$0xff]
    %v293 = vld [vmem:[#allocation8 + $0x38] sm:$0xff]
    %v294 = vld [vmem:[#allocation8 + $0x40] sm:$0xff]
    %v295 = vld [vmem:[#allocation8 + $0x48] sm:$0xff]
    %v296 = vld [vmem:[#allocation8 + $0x50] sm:$0xff]
    %v297 = vld [vmem:[#allocation8 + $0x58] sm:$0xff]
    %v298 = vld [vmem:[#allocation8 + $0x60] sm:$0xff]
    %v299 = vld [vmem:[#allocation8 + $0x68] sm:$0xff]
    %v300 = vld [vmem:[#allocation8 + $0x70] sm:$0xff]
    %v301 = vld [vmem:[#allocation8 + $0x78] sm:$0xff]
    %v302 = vld [vmem:[%s6] sm:$0x1]
    %v304 = vlaneseq
    %v305 = vshrl.u32 %v304, 7
    %v306 = vsub.s32 0, %v305
    %v307 = vrot.slane %v302, %v306
    %309 = vmatprep.subr.mxu0 0.0
    %310 = vmatpush1.msra.mxu0 %v286
    %311 = vmatprep.subr.mxu0 0.0
    %312 = vmatpush1.msra.mxu0 %v287
    %313 = vmatprep.subr.mxu0 0.0
    %314 = vmatpush1.msra.mxu0 %v288
    %315 = vmatprep.subr.mxu0 0.0
    %316 = vmatpush1.msra.mxu0 %v289
    %317 = vmatprep.subr.mxu0 0.0
    %318 = vmatpush1.msra.mxu0 %v290
    %319 = vmatprep.subr.mxu0 0.0
    %320 = vmatpush1.msra.mxu0 %v291
    %321 = vmatprep.subr.mxu0 0.0
    %322 = vmatpush1.msra.mxu0 %v292
    %323 = vmatprep.subr.mxu0 0.0
    %324 = vmatpush1.msra.mxu0 %v293
    %325 = vmatprep.subr.mxu0 0.0
    %326 = vmatpush1.msra.mxu0 %v294
    %327 = vmatprep.subr.mxu0 0.0
    %328 = vmatpush1.msra.mxu0 %v295
    %329 = vmatprep.subr.mxu0 0.0
    %330 = vmatpush1.msra.mxu0 %v296
    %331 = vmatprep.subr.mxu0 0.0
    %332 = vmatpush1.msra.mxu0 %v297
    %333 = vmatprep.subr.mxu0 0.0
    %334 = vmatpush1.msra.mxu0 %v298
    %335 = vmatprep.subr.mxu0 0.0
    %336 = vmatpush1.msra.mxu0 %v299
    %337 = vmatprep.subr.mxu0 0.0
    %338 = vmatpush1.msra.mxu0 %v300
    %339 = vmatprep.subr.mxu0 0.0
    %340 = vmatpush1.msra.mxu0 %v301
    %341 = vmatprep.subr.mxu0 0.0
    %342 = vmatpush1.msra.mxu0 0.0
    %343 = vmatprep.subr.mxu0 0.0
    %344 = vmatpush1.msra.mxu0 0.0
    %345 = vmatprep.subr.mxu0 0.0
    %346 = vmatpush1.msra.mxu0 0.0
    %347 = vmatprep.subr.mxu0 0.0
    %348 = vmatpush1.msra.mxu0 0.0
    %349 = vmatprep.subr.mxu0 0.0
    %350 = vmatpush1.msra.mxu0 0.0
    %351 = vmatprep.subr.mxu0 0.0
    %352 = vmatpush1.msra.mxu0 0.0
    %353 = vmatprep.subr.mxu0 0.0
    %354 = vmatpush1.msra.mxu0 0.0
    %355 = vmatprep.subr.mxu0 0.0
    %356 = vmatpush1.msra.mxu0 0.0
    %357 = vmatprep.subr.mxu0 0.0
    %358 = vmatpush1.msra.mxu0 0.0
    %359 = vmatprep.subr.mxu0 0.0
    %360 = vmatpush1.msra.mxu0 0.0
    %361 = vmatprep.subr.mxu0 0.0
    %362 = vmatpush1.msra.mxu0 0.0
    %363 = vmatprep.subr.mxu0 0.0
    %364 = vmatpush1.msra.mxu0 0.0
    %365 = vmatprep.subr.mxu0 0.0
    %366 = vmatpush1.msra.mxu0 0.0
    %367 = vmatprep.subr.mxu0 0.0
    %368 = vmatpush1.msra.mxu0 0.0
    %369 = vmatprep.subr.mxu0 0.0
    %370 = vmatpush1.msra.mxu0 0.0
    %371 = vmatprep.subr.mxu0 0.0
    %372 = vmatpush1.msra.mxu0 0.0
    %373 = vmatprep.mubr.f32.mxu0 0.0
    %374 = vmatmul.mubr.f32.gmra.mrb[0].mxu0 %v284
    %v375 = vpop.f32.mrb[0].mxu0
    %v376 = vadd.f32 %v307, %v375
    %v377 = vpop.f32.mrb[0].mxu0
    %378 = vmatprep.mubr.f32.mxu0 0.0
    %379 = vmatmul.mubr.f32.gmra.mrb[0].mxu0 %v285
    %v380 = vpop.f32.mrb[0].mxu0
    %v381 = vadd.f32 %v307, %v380
    %v382 = vpop.f32.mrb[0].mxu0
    %383 = vdwg.mxu0
    %384 = vst [vmem:[#allocation10] sm:$0xff] %v376
    %385 = vst [vmem:[#allocation10 + $0x8] sm:$0xff] %v381
    // Predicated region
    $region46: #{tpu_custom_call.1} parent=1 // pred_check
      _
    $region47: #{tpu_custom_call.1} parent=1 // pred_check_branch
      %387 = sbr.rel (0) target = $region49
    $region48: #{tpu_custom_call.1} parent=1 // pred_region
      %s389 = ssub.s32 256, 128
      %390 = vsyncadd [#allocation4], %s389
      %s391 = sshll.u32 [#allocation10], 4
      %s392 = int_to_ptr.vmem [resolvable:$true] %s391
      %397 = dma.vmem_to_hbm [thread:$0]  %s392, 128, %s7, [#allocation4], 128, 128, 8
    $region49: #{tpu_custom_call.1} parent=1 // pred_fallthru
      _
    // Predicated region
    $region50: #{tpu_custom_call.1} parent=1 // pred_check
      _
    $region51: #{tpu_custom_call.1} parent=1 // pred_check_branch
      %399 = sbr.rel (0) target = $region53
    $region52: #{tpu_custom_call.1} parent=1 // pred_region
      %400 = dma.done [#allocation4], 256
    $region53: #{tpu_custom_call.1} parent=1 // pred_fallthru
      _
    %401 = vsyncpa [#allocation3], 1
    %402 = vsyncpa [#allocation6], 1
    %403 = vsyncpa [#allocation9], 1
    %404 = vsyncpa [#allocation4], 1

</llo_original>
